<compile_context>
chip_gen: v7x
topology: tpu7x:2x2x1
jax: 0.10.0
libtpu: 0.0.40
codegen_flags: <defaults>
</compile_context>

<pallas_src>
import functools

import numpy as np
import jax
import jax.numpy as jnp
from jax.experimental import pallas as pl
from jax.experimental.pallas import tpu as pltpu


def _fps_kernel(init_ref, pos_ref, out_ref, dist_ref, idx_ref, *,
                npoints, n_valid, n_pad, npoints_pad, bt, C):
    # init_ref : VMEM (1, bt, 1)           int32   -- initial farthest index per batch row
    # pos_ref  : VMEM (1, C, bt, n_pad)    float32 -- bt batches, point axis N on lanes
    # out_ref  : VMEM (1, bt, npoints_pad) int32   -- sampled indices for these batches
    # dist_ref : VMEM (bt, n_pad)          float32 -- running min squared distance
    # idx_ref  : VMEM (bt, n_pad)          int32   -- lane index table (0..n_pad-1)

    # ---- per-grid-step init ----------------------------------------------------
    col = jax.lax.broadcasted_iota(jnp.int32, (bt, n_pad), 1)
    idx_ref[...] = col
    # Valid lanes start at 1e10 (matches the torch init); padded lanes start at -1
    # so the argmax can never select them (real squared distances are >= 0).
    dist_ref[...] = jnp.where(col < n_valid, jnp.float32(1e10), jnp.float32(-1.0))
    out_ref[...] = jnp.zeros_like(out_ref)

    out_col = jax.lax.broadcasted_iota(jnp.int32, (bt, npoints_pad), 1)

    def body(i, farthest):                      # farthest: (bt, 1) int32 vector carry
        # centroids[:, i] = farthest  (masked lane write; cheap for small npoints_pad)
        out_ref[0] = jnp.where(out_col == i, farthest, out_ref[0])

        idx = idx_ref[...]                      # reload each iter (don't hoist)
        sel = idx == farthest                   # (bt, n_pad), exactly one hit per row

        # dist = sum_c (p_c - centroid_c)^2  -- per-channel VPU terms, no sublane reduce.
        # centroid gather is an exact masked lane-reduce (single nonzero term per row).
        dist = None
        for c in range(C):
            pc = pos_ref[0, c]                  # (bt, n_pad), reloaded each iteration
            centroid_c = jnp.sum(jnp.where(sel, pc, 0.0), axis=-1, keepdims=True)
            dc = pc - centroid_c
            dist = dc * dc if dist is None else dist + dc * dc

        # torch: mask = dist < distance; distance[mask] = dist[mask]  == elementwise min
        d = jnp.minimum(dist_ref[...], dist)
        dist_ref[...] = d

        # per-row argmax with first-occurrence tie-break, kept as a (bt, 1) vector
        max_val = jnp.max(d, axis=-1, keepdims=True)
        nxt = jnp.min(jnp.where(d == max_val, idx, jnp.int32(n_pad)),
                      axis=-1, keepdims=True)
        return nxt.astype(jnp.int32)

    jax.lax.fori_loop(0, npoints, body, init_ref[0].astype(jnp.int32))


def farthest_point_sample(pos, init_farthest, npoints, *, batch_tile=None):
    """Pallas FPS.

    pos:           (B, N, C) float
    init_farthest: (B,) int  -- initial farthest index per batch (torch.randint stand-in)
    returns:       (B, npoints) int32 point indices
    """
    B, N, C = pos.shape
    if batch_tile is None:
        # Pack up to 8 batches onto the sublane axis.  On v7x (2 TensorCores) with
        # small B, pass batch_tile = max(1, B // 2) so the parallel grid stays >= 2.
        batch_tile = min(8, B)
    bt = batch_tile
    nb = -(-B // bt)
    b_pad = nb * bt
    n_pad = -(-N // 128) * 128
    npoints_pad = -(-npoints // 128) * 128

    pos_f = pos.astype(jnp.float32)
    init_i = init_farthest.astype(jnp.int32)
    if b_pad != B:
        pos_f = jnp.pad(pos_f, ((0, b_pad - B), (0, 0), (0, 0)))
        init_i = jnp.pad(init_i, ((0, b_pad - B),))

    # Lane-dense, sublane-packed layout: (b_pad, N, C) -> (nb, C, bt, n_pad).
    pos_t = jnp.transpose(pos_f, (0, 2, 1))                      # (b_pad, C, N)
    if n_pad != N:
        pos_t = jnp.pad(pos_t, ((0, 0), (0, 0), (0, n_pad - N)))
    pos_t = pos_t.reshape(nb, bt, C, n_pad).transpose(0, 2, 1, 3)  # (nb, C, bt, n_pad)

    init_t = init_i.reshape(nb, bt, 1)                           # (nb, bt, 1)

    kernel = functools.partial(
        _fps_kernel, npoints=npoints, n_valid=N, n_pad=n_pad,
        npoints_pad=npoints_pad, bt=bt, C=C)

    grid_spec = pltpu.PrefetchScalarGridSpec(
        num_scalar_prefetch=0,
        grid=(nb,),
        in_specs=[
            pl.BlockSpec((1, bt, 1), lambda g: (g, 0, 0)),
            pl.BlockSpec((1, C, bt, n_pad), lambda g: (g, 0, 0, 0)),
        ],
        out_specs=pl.BlockSpec((1, bt, npoints_pad), lambda g: (g, 0, 0)),
        scratch_shapes=[
            pltpu.VMEM((bt, n_pad), jnp.float32),   # running min squared distance
            pltpu.VMEM((bt, n_pad), jnp.int32),     # lane index table
        ],
    )

    out = pl.pallas_call(
        kernel,
        grid_spec=grid_spec,
        out_shape=jax.ShapeDtypeStruct((nb, bt, npoints_pad), jnp.int32),
        compiler_params=pltpu.CompilerParams(
            dimension_semantics=("parallel",)),     # v7x: shard batch tiles over 2 TCs
    )(init_t, pos_t)

    return out.reshape(b_pad, npoints_pad)[:B, :npoints]


def _fps_reference(pos, init_farthest, npoints):
    """Pure NumPy port of the PyTorch forward (same math, int32 indices)."""
    B, N, C = pos.shape
    centroids = np.zeros((B, npoints), dtype=np.int32)
    distance = np.full((B, N), 1e10, dtype=np.float32)
    farthest = np.array(init_farthest, dtype=np.int64)
    batch_indices = np.arange(B)
    for i in range(npoints):
        centroids[:, i] = farthest
        centroid = pos[batch_indices, farthest, :].reshape(B, 1, C)
        dist = np.sum((pos - centroid) ** 2, -1)
        mask = dist < distance
        distance[mask] = dist[mask]
        farthest = np.argmax(distance, -1)
    return centroids


if __name__ == "__main__":
    key = jax.random.PRNGKey(0)

    # Configs exercise: full 8-wide sublane packing, N padding (N % 128 != 0),
    # and batch padding (B % batch_tile != 0).
    for (B, N, C, npoints) in [(8, 128, 3, 8), (2, 200, 3, 16), (10, 192, 3, 12)]:
        key, k_pos, k_init = jax.random.split(key, 3)
        pos = jax.random.normal(k_pos, (B, N, C), dtype=jnp.float32)
        # Deterministic stand-in for torch.randint(0, N, (B,)) initial farthest index.
        init_farthest = jax.random.randint(k_init, (B,), 0, N, dtype=jnp.int32)

        out = farthest_point_sample(pos, init_farthest, npoints)
        out = jax.block_until_ready(out)

        ref = _fps_reference(np.asarray(pos), np.asarray(init_farthest), npoints)
        assert out.shape == (B, npoints) and out.dtype == jnp.int32
        np.testing.assert_array_equal(np.asarray(out), ref)

    print("KERNEL_OK")
</pallas_src>

<mosaic_0001>
module attributes {stable_mosaic.version = 11 : i64} {
  func.func @_fps_kernel(%arg0: i32, %arg1: memref<1x8x1xi32, #tpu.memory_space<vmem>>, %arg2: memref<1x3x8x128xf32, #tpu.memory_space<vmem>>, %arg3: memref<1x8x128xi32, #tpu.memory_space<vmem>>, %arg4: memref<8x128xf32, #tpu.memory_space<vmem>>, %arg5: memref<8x128xi32, #tpu.memory_space<vmem>>) attributes {dimension_semantics = [#tpu.dimension_semantics<parallel>], iteration_bounds = array<i64: 1>, scalar_prefetch = 0 : i64, scratch_operands = 2 : i64, tpu.core_type = #tpu.core_type<tc>, window_params = [{transform_indices = @transform_0, window_bounds = array<i64: 1, 8, 1>}, {transform_indices = @transform_1, window_bounds = array<i64: 1, 3, 8, 128>}, {transform_indices = @transform_2, window_bounds = array<i64: 1, 8, 128>}]} {
    %0 = tpu.iota {dimensions = array<i32: 1>} : vector<8x128xi32>
    %c0 = arith.constant 0 : index
    %c0_0 = arith.constant 0 : index
    %1 = vector.load %arg5[%c0, %c0_0] : memref<8x128xi32, #tpu.memory_space<vmem>>, vector<8x128xi32>
    tpu.vector_store %arg5[%c0, %c0_0], %0 {strides = array<i32>} : memref<8x128xi32, #tpu.memory_space<vmem>>, vector<8x128xi32>,
    %c128_i32 = arith.constant 128 : i32
    %2 = vector.broadcast %c128_i32 : i32 to vector<8x128xi32>
    %3 = arith.cmpi slt, %0, %2 : vector<8x128xi32>
    %cst = arith.constant 1.000000e+10 : f32
    %cst_1 = arith.constant -1.000000e+00 : f32
    %4 = vector.broadcast %cst : f32 to vector<8x128xf32>
    %5 = vector.broadcast %cst_1 : f32 to vector<8x128xf32>
    %6 = arith.select %3, %4, %5 : vector<8x128xi1>, vector<8x128xf32>
    %c0_2 = arith.constant 0 : index
    %c0_3 = arith.constant 0 : index
    %7 = vector.load %arg4[%c0_2, %c0_3] : memref<8x128xf32, #tpu.memory_space<vmem>>, vector<8x128xf32>
    tpu.vector_store %arg4[%c0_2, %c0_3], %6 {strides = array<i32>} : memref<8x128xf32, #tpu.memory_space<vmem>>, vector<8x128xf32>,
    %c0_i32 = arith.constant 0 : i32
    %8 = vector.broadcast %c0_i32 : i32 to vector<1x8x128xi32>
    %c0_4 = arith.constant 0 : index
    %c0_5 = arith.constant 0 : index
    %c0_6 = arith.constant 0 : index
    %9 = vector.load %arg3[%c0_4, %c0_5, %c0_6] : memref<1x8x128xi32, #tpu.memory_space<vmem>>, vector<1x8x128xi32>
    tpu.vector_store %arg3[%c0_4, %c0_5, %c0_6], %8 {strides = array<i32>} : memref<1x8x128xi32, #tpu.memory_space<vmem>>, vector<1x8x128xi32>,
    %10 = tpu.iota {dimensions = array<i32: 1>} : vector<8x128xi32>
    %c0_7 = arith.constant 0 : index
    %c0_8 = arith.constant 0 : index
    %c0_9 = arith.constant 0 : index
    %11 = vector.load %arg1[%c0_7, %c0_8, %c0_9] : memref<1x8x1xi32, #tpu.memory_space<vmem>>, vector<1x8x1xi32>
    %12 = vector.shape_cast %11 : vector<1x8x1xi32> to vector<8x1xi32>
    %c0_i32_10 = arith.constant 0 : i32
    %c8_i32 = arith.constant 8 : i32
    %13 = arith.addi %c0_i32_10, %c8_i32 : i32
    %c1_i32 = arith.constant 1 : i32
    %14 = scf.for %arg6 = %c0_i32_10 to %13 step %c1_i32 iter_args(%arg7 = %12) -> (vector<8x1xi32>)  : i32 {
      %15 = vector.broadcast %arg6 : i32 to vector<8x128xi32>
      %16 = arith.cmpi eq, %10, %15 : vector<8x128xi32>
      %c0_12 = arith.constant 0 : index
      %c0_13 = arith.constant 0 : index
      %c0_14 = arith.constant 0 : index
      %17 = vector.load %arg3[%c0_12, %c0_13, %c0_14] : memref<1x8x128xi32, #tpu.memory_space<vmem>>, vector<1x8x128xi32>
      %18 = vector.shape_cast %17 : vector<1x8x128xi32> to vector<8x128xi32>
      %19 = vector.shape_cast %arg7 : vector<8x1xi32> to vector<8x1xi32>
      %20 = vector.broadcast %19 : vector<8x1xi32> to vector<8x128xi32>
      %21 = arith.select %16, %20, %18 : vector<8x128xi1>, vector<8x128xi32>
      %c0_15 = arith.constant 0 : index
      %c0_16 = arith.constant 0 : index
      %c0_17 = arith.constant 0 : index
      %22 = vector.load %arg3[%c0_15, %c0_16, %c0_17] : memref<1x8x128xi32, #tpu.memory_space<vmem>>, vector<1x8x128xi32>
      %23 = vector.shape_cast %22 : vector<1x8x128xi32> to vector<8x128xi32>
      %24 = vector.shape_cast %21 : vector<8x128xi32> to vector<1x8x128xi32>
      tpu.vector_store %arg3[%c0_15, %c0_16, %c0_17], %24 {strides = array<i32>} : memref<1x8x128xi32, #tpu.memory_space<vmem>>, vector<1x8x128xi32>,
      %c0_18 = arith.constant 0 : index
      %c0_19 = arith.constant 0 : index
      %25 = vector.load %arg5[%c0_18, %c0_19] : memref<8x128xi32, #tpu.memory_space<vmem>>, vector<8x128xi32>
      %26 = vector.broadcast %arg7 : vector<8x1xi32> to vector<8x128xi32>
      %27 = arith.cmpi eq, %25, %26 : vector<8x128xi32>
      %c0_20 = arith.constant 0 : index
      %c0_21 = arith.constant 0 : index
      %c0_22 = arith.constant 0 : index
      %c0_23 = arith.constant 0 : index
      %28 = vector.load %arg2[%c0_20, %c0_21, %c0_22, %c0_23] : memref<1x3x8x128xf32, #tpu.memory_space<vmem>>, vector<1x1x8x128xf32>
      %29 = vector.shape_cast %28 : vector<1x1x8x128xf32> to vector<8x128xf32>
      %cst_24 = arith.constant 0.000000e+00 : f32
      %30 = vector.broadcast %cst_24 : f32 to vector<8x128xf32>
      %31 = arith.select %27, %29, %30 : vector<8x128xi1>, vector<8x128xf32>
      %cst_25 = arith.constant dense<0.000000e+00> : vector<8xf32>
      %32 = vector.multi_reduction <add>, %31, %cst_25 [1] : vector<8x128xf32> to vector<8xf32>
      %33 = vector.shape_cast %32 : vector<8xf32> to vector<8x1xf32>
      %34 = vector.broadcast %33 : vector<8x1xf32> to vector<8x128xf32>
      %35 = arith.subf %29, %34 : vector<8x128xf32>
      %36 = arith.mulf %35, %35 : vector<8x128xf32>
      %c0_26 = arith.constant 0 : index
      %c1 = arith.constant 1 : index
      %c0_27 = arith.constant 0 : index
      %c0_28 = arith.constant 0 : index
      %37 = vector.load %arg2[%c0_26, %c1, %c0_27, %c0_28] : memref<1x3x8x128xf32, #tpu.memory_space<vmem>>, vector<1x1x8x128xf32>
      %38 = vector.shape_cast %37 : vector<1x1x8x128xf32> to vector<8x128xf32>
      %cst_29 = arith.constant 0.000000e+00 : f32
      %39 = vector.broadcast %cst_29 : f32 to vector<8x128xf32>
      %40 = arith.select %27, %38, %39 : vector<8x128xi1>, vector<8x128xf32>
      %cst_30 = arith.constant dense<0.000000e+00> : vector<8xf32>
      %41 = vector.multi_reduction <add>, %40, %cst_30 [1] : vector<8x128xf32> to vector<8xf32>
      %42 = vector.shape_cast %41 : vector<8xf32> to vector<8x1xf32>
      %43 = vector.broadcast %42 : vector<8x1xf32> to vector<8x128xf32>
      %44 = arith.subf %38, %43 : vector<8x128xf32>
      %45 = arith.mulf %44, %44 : vector<8x128xf32>
      %46 = arith.addf %36, %45 : vector<8x128xf32>
      %c0_31 = arith.constant 0 : index
      %c2 = arith.constant 2 : index
      %c0_32 = arith.constant 0 : index
      %c0_33 = arith.constant 0 : index
      %47 = vector.load %arg2[%c0_31, %c2, %c0_32, %c0_33] : memref<1x3x8x128xf32, #tpu.memory_space<vmem>>, vector<1x1x8x128xf32>
      %48 = vector.shape_cast %47 : vector<1x1x8x128xf32> to vector<8x128xf32>
      %cst_34 = arith.constant 0.000000e+00 : f32
      %49 = vector.broadcast %cst_34 : f32 to vector<8x128xf32>
      %50 = arith.select %27, %48, %49 : vector<8x128xi1>, vector<8x128xf32>
      %cst_35 = arith.constant dense<0.000000e+00> : vector<8xf32>
      %51 = vector.multi_reduction <add>, %50, %cst_35 [1] : vector<8x128xf32> to vector<8xf32>
      %52 = vector.shape_cast %51 : vector<8xf32> to vector<8x1xf32>
      %53 = vector.broadcast %52 : vector<8x1xf32> to vector<8x128xf32>
      %54 = arith.subf %48, %53 : vector<8x128xf32>
      %55 = arith.mulf %54, %54 : vector<8x128xf32>
      %56 = arith.addf %46, %55 : vector<8x128xf32>
      %c0_36 = arith.constant 0 : index
      %c0_37 = arith.constant 0 : index
      %57 = vector.load %arg4[%c0_36, %c0_37] : memref<8x128xf32, #tpu.memory_space<vmem>>, vector<8x128xf32>
      %58 = arith.minimumf %57, %56 : vector<8x128xf32>
      %c0_38 = arith.constant 0 : index
      %c0_39 = arith.constant 0 : index
      %59 = vector.load %arg4[%c0_38, %c0_39] : memref<8x128xf32, #tpu.memory_space<vmem>>, vector<8x128xf32>
      tpu.vector_store %arg4[%c0_38, %c0_39], %58 {strides = array<i32>} : memref<8x128xf32, #tpu.memory_space<vmem>>, vector<8x128xf32>,
      %cst_40 = arith.constant dense<0xFF800000> : vector<8xf32>
      %60 = vector.multi_reduction <maximumf>, %58, %cst_40 [1] : vector<8x128xf32> to vector<8xf32>
      %61 = vector.shape_cast %60 : vector<8xf32> to vector<8x1xf32>
      %62 = vector.broadcast %61 : vector<8x1xf32> to vector<8x128xf32>
      %63 = arith.cmpf oeq, %58, %62 : vector<8x128xf32>
      %c128_i32_41 = arith.constant 128 : i32
      %64 = vector.broadcast %c128_i32_41 : i32 to vector<8x128xi32>
      %65 = arith.select %63, %25, %64 : vector<8x128xi1>, vector<8x128xi32>
      %cst_42 = arith.constant dense<2147483647> : vector<8xi32>
      %66 = vector.multi_reduction <minsi>, %65, %cst_42 [1] : vector<8x128xi32> to vector<8xi32>
      %67 = vector.shape_cast %66 : vector<8xi32> to vector<8x1xi32>
      scf.yield %67 : vector<8x1xi32>
    }
    %c8_i32_11 = arith.constant 8 : i32
    return
  }
  func.func @transform_0(%arg0: i32) -> (i32, i32, i32) {
    %c0_i32 = arith.constant 0 : i32
    %c0_i32_0 = arith.constant 0 : i32
    %c0_i32_1 = arith.constant 0 : i32
    return %arg0, %c0_i32, %c0_i32_0 : i32, i32, i32
  }
  func.func @transform_1(%arg0: i32) -> (i32, i32, i32, i32) {
    %c0_i32 = arith.constant 0 : i32
    %c0_i32_0 = arith.constant 0 : i32
    %c0_i32_1 = arith.constant 0 : i32
    %c0_i32_2 = arith.constant 0 : i32
    return %arg0, %c0_i32, %c0_i32_0, %c0_i32_1 : i32, i32, i32, i32
  }
  func.func @transform_2(%arg0: i32) -> (i32, i32, i32) {
    %c0_i32 = arith.constant 0 : i32
    %c0_i32_0 = arith.constant 0 : i32
    %c0_i32_1 = arith.constant 0 : i32
    return %arg0, %c0_i32, %c0_i32_0 : i32, i32, i32
  }
}

</mosaic_0001>

<llo_original>
// kernel: tpu_custom_call.1
$region0: #{tpu_custom_call.1}
  #allocation0 [shape = 'u32[]', space=smem, size = 0x4, offset = 0x4, fixed_abs, tag = 'smem constant byte address 0x4 - core index']
  #allocation1 [shape = 'u32[144,128]{1,0:T(1,128)}', space=vmem, size = 0x12000, scoped, tag = 'internal scratch']
  #allocation2 [shape = 'f32[8,128]{1,0:T(8,128)}', space=vmem, size = 0x1000, scoped, tag = 'scratch operand']
  #allocation3 [shape = 's32[8,128]{1,0:T(8,128)}', space=vmem, size = 0x1000, scoped, tag = 'scratch operand']
  %s0 = inlined_call_operand.vmem [shape: s32[1,8,1], index: 0, kind: input, shape index: {}]
  %s1 = inlined_call_operand.hbm [shape: f32[1,3,8,128], index: 1, kind: input, shape index: {}]
  %s2 = inlined_call_operand.hbm [shape: s32[1,8,128], index: 2, kind: output, shape index: {}]
  %s3 = sld [smem:[#allocation0]]
  $region29: #{tpu_custom_call.1} parent=0
    _
  %s5 = ssub.s32 1, %s3
  %s6 = scalar_select 0, %s5, %s3
  $region1: #{tpu_custom_call.1} parent=0
    #allocation4 [shape = 'u8[12288]{0}', space=vmem, size = 0x3000, scoped, tag = 'input window, operand 1, single buffered']
    #allocation5 [shape = 's32[1]{0}', space=sflag, size = 0x4, scoped, tag = 'scoped memory for tpu_custom_call.1']
    #allocation6 [shape = 's32[1]{0}', space=sflag, size = 0x4, scoped, tag = 'scoped memory for tpu_custom_call.1']
    #allocation7 [shape = 'u8[4096]{0}', space=vmem, size = 0x1000, scoped, tag = 'output window, operand 0, single buffered']
    %7 = vsyncpa [#allocation5], 0
    %8 = vsyncpa [#allocation6], 0
    // Predicated region
    $region2: #{tpu_custom_call.1} parent=1 // pred_check
      _
    $region3: #{tpu_custom_call.1} parent=1 // pred_check_branch
      %10 = sbr.rel (0) target = $region5
    $region4: #{tpu_custom_call.1} parent=1 // pred_region
      _
    $region5: #{tpu_custom_call.1} parent=1 // pred_fallthru
      _
    // Predicated region
    $region6: #{tpu_custom_call.1} parent=1 // pred_check
      _
    $region7: #{tpu_custom_call.1} parent=1 // pred_check_branch
      %12 = sbr.rel (0) target = $region9
    $region8: #{tpu_custom_call.1} parent=1 // pred_region
      %s14 = ssub.s32 384, 384
      %15 = vsyncadd [#allocation5], %s14
      %s16 = sshll.u32 [#allocation4], 4
      %s17 = int_to_ptr.vmem [resolvable:$true] %s16
      %22 = dma.hbm_to_vmem [thread:$0]  %s1, 384, %s17, [#allocation5], 128, 128, 8
    $region9: #{tpu_custom_call.1} parent=1 // pred_fallthru
      _
    // Predicated region
    $region10: #{tpu_custom_call.1} parent=1 // pred_check
      _
    $region11: #{tpu_custom_call.1} parent=1 // pred_check_branch
      %24 = sbr.rel (0) target = $region13
    $region12: #{tpu_custom_call.1} parent=1 // pred_region
      %25 = dma.done [#allocation5], 384
    $region13: #{tpu_custom_call.1} parent=1 // pred_fallthru
      _
    %v26 = vlaneseq
    %v27 = vand.u32 %v26, 127
    %28 = vst [vmem:[#allocation3] sm:$0xff] %v27
    %vm29 = vcmp.lt.s32.totalorder %v27, 128
    %v30 = vsel %vm29, 1e+10, -1.0
    %31 = vst [vmem:[#allocation2] sm:$0xff] %v30
    %32 = vst [vmem:[#allocation7] sm:$0xff] 0
    %v33 = vld [vmem:[%s0] sm:$0xff]
    loop: start=0, step=1, limit=8
    $region14: #{tpu_custom_call.1} parent=1 // loop_pre_header
      _
    $region15: #{tpu_custom_call.1} parent=1 // loop_header
      %s35 = sphi 0, %s39
      %p36 = scmp.ge.s32.totalorder %s35, 8
      %v40 = vphi %v33, %v93
    $region16: #{tpu_custom_call.1} parent=1 // loop_header_branch
      %38 = sbr.rel (%p36) target = $region20
    $region17: #{tpu_custom_call.1} parent=1 // loop_body
      %v41 = vstv %s35
      %vm42 = vcmp.eq.s32.totalorder %v27, %v41
      %v43 = vld [vmem:[#allocation7] sm:$0xff]
      %44 = vset.pattern.permute.xlu0 0
      %45 = vperm.xlu0 %44, %v40
      %v46 = vpop.permute.xlu0 %45
      %v47 = vsel %vm42, %v46, %v43
      %48 = vst [vmem:[#allocation7] sm:$0xff] %v47
      %v49 = vld [vmem:[#allocation3] sm:$0xff]
      %vm50 = vcmp.eq.s32.totalorder %v49, %v46
      %v51 = vld [vmem:[#allocation4] sm:$0xff]
      %v52 = vsel %vm50, %v51, 0.0
      %53 = vadd.xlane.f32.xlu0 %v52
      %v54 = vpop.xlane.xlu0 %53
      %v55 = vsub.f32 %v51, %v54
      %v56 = vmul.f32 %v55, %v55
      %s57 = scalar_lea.vmem [#allocation4], 8
      %v58 = vld [vmem:[%s57] sm:$0xff]
      %v59 = vsel %vm50, %v58, 0.0
      %60 = vadd.xlane.f32.xlu0 %v59
      %v61 = vpop.xlane.xlu0 %60
      %v62 = vsub.f32 %v58, %v61
      %v63 = vmul.f32 %v62, %v62
      %v64 = vadd.f32 %v56, %v63
      %s65 = scalar_lea.vmem [#allocation4], 16
      %v66 = vld [vmem:[%s65] sm:$0xff]
      %v67 = vsel %vm50, %v66, 0.0
      %68 = vadd.xlane.f32.xlu0 %v67
      %v69 = vpop.xlane.xlu0 %68
      %v70 = vsub.f32 %v66, %v69
      %v71 = vmul.f32 %v70, %v70
      %v72 = vadd.f32 %v64, %v71
      %v73 = vld [vmem:[#allocation2] sm:$0xff]
      %v74 = vmin.f32 %v73, %v72
      %75 = vst [vmem:[#allocation2] sm:$0xff] %v74
      %76 = vmax.xlane.f32.xlu0 %v74
      %v77 = vpop.xlane.xlu0 %76
      %vm78 = vcmp.eq.f32.partialorder %v74, %v77
      %v79 = vsel %vm78, %v49, 128
      %v80 = vand.u32 %v79, 65535
      %v81 = vshra.s32 %v79, 16
      %v82 = vcvt.s32.f32 %v80
      %v83 = vcvt.s32.f32 %v81
      %84 = vmin.xlane.f32.xlu0 %v83
      %v85 = vpop.xlane.xlu0 %84
      %vm86 = vcmp.eq.f32.partialorder %v83, %v85
      %v87 = vsel %vm86, %v82, inf
      %88 = vmin.xlane.f32.xlu0 %v87
      %v89 = vpop.xlane.xlu0 %88
      %v90 = vcvt.f32.s32 %v89
      %v91 = vcvt.f32.s32 %v85
      %v92 = vshll.u32 %v91, 16
      %v93 = vadd.s32 %v92, %v90
    $region18: #{tpu_custom_call.1} parent=1 // loop_footer
      %s39 = sadd.s32 1, %s35
    $region19: #{tpu_custom_call.1} parent=1 // loop_footer_branch
      %34 = sbr.rel target = $region15
    $region20: #{tpu_custom_call.1} parent=1 // loop_exit
      _
    // Predicated region
    $region21: #{tpu_custom_call.1} parent=1 // pred_check
      _
    $region22: #{tpu_custom_call.1} parent=1 // pred_check_branch
      %95 = sbr.rel (0) target = $region24
    $region23: #{tpu_custom_call.1} parent=1 // pred_region
      %s97 = ssub.s32 128, 128
      %98 = vsyncadd [#allocation6], %s97
      %s100 = sshll.u32 [#allocation7], 4
      %s101 = int_to_ptr.vmem [resolvable:$true] %s100
      %103 = dma.vmem_to_hbm [thread:$0]  %s101, 128, %s2, [#allocation6]
    $region24: #{tpu_custom_call.1} parent=1 // pred_fallthru
      _
    // Predicated region
    $region25: #{tpu_custom_call.1} parent=1 // pred_check
      _
    $region26: #{tpu_custom_call.1} parent=1 // pred_check_branch
      %105 = sbr.rel (0) target = $region28
    $region27: #{tpu_custom_call.1} parent=1 // pred_region
      %106 = dma.done [#allocation6], 128
    $region28: #{tpu_custom_call.1} parent=1 // pred_fallthru
      _
    %107 = vsyncpa [#allocation5], 1
    %108 = vsyncpa [#allocation6], 1

</llo_original>
